<compile_context>
chip_gen: v7x
topology: tpu7x:2x2x1
jax: 0.10.0
libtpu: 0.0.40
codegen_flags: <defaults>
</compile_context>

<pallas_src>
import jax
import jax.numpy as jnp
from jax.experimental import pallas as pl
from jax.experimental.pallas import tpu as pltpu

LANE = 128  # TPU lane width; W is processed in 128-wide tiles.


# ----------------------------- kernel -------------------------------------- #

def _flip_kernel(flag_ref, img_ref, bbox_ref, img_out_ref, bbox_out_ref):
    # flag_ref:     SMEM (1,) int32 scalar prefetch (1 = flip, 0 = passthrough)
    # img_ref:      (block_rows, 128) VMEM tile (already the mirrored W-tile
    #               when flipping, selected by the input index_map)
    # bbox_ref:     (B, 5) VMEM, resident across the whole grid
    # img_out_ref:  (block_rows, 128) VMEM tile
    # bbox_out_ref: (1, B, 5) VMEM (one copy per row-block)
    flag = flag_ref[0]

    @pl.when(flag == 1)
    def _do_flip():
        # 128x128 reversal permutation P[i, 127-i] = 1, built in-kernel.
        r = jax.lax.broadcasted_iota(jnp.int32, (LANE, LANE), 0)
        c = jax.lax.broadcasted_iota(jnp.int32, (LANE, LANE), 1)
        perm = jnp.where(r + c == LANE - 1, 1.0, 0.0).astype(img_ref.dtype)
        img_out_ref[...] = jnp.dot(
            img_ref[...], perm, preferred_element_type=jnp.float32
        ).astype(img_out_ref.dtype)

        b = bbox_ref[...]
        col = jax.lax.broadcasted_iota(jnp.int32, b.shape, 1)
        bbox_out_ref[0] = jnp.where(col == 1, 1.0 - b, b).astype(
            bbox_out_ref.dtype)

    @pl.when(flag == 0)
    def _passthrough():
        img_out_ref[...] = img_ref[...]
        bbox_out_ref[0] = bbox_ref[...]


# ----------------------------- wrapper ------------------------------------- #

def _pick_block_rows(total_rows, target=512):
    """Largest divisor of total_rows that is a multiple of 8 (or the full
    extent), capped at `target`, leaving >= 2 grid steps when possible so the
    'parallel' row axis can shard across v7x's two TensorCores."""
    cap = min(target, total_rows)
    if total_rows >= 16:
        cap = min(cap, total_rows // 2)
    for tr in range(cap, 0, -1):
        if total_rows % tr == 0 and (tr % 8 == 0 or tr == total_rows):
            return tr
    return total_rows


def random_horizontal_flip(img, bboxes, flip_flag):
    """img: (N, C, H, W) float; bboxes: (B, 5) float; flip_flag: (1,) int32."""
    N, C, H, W = img.shape
    B, F = bboxes.shape

    if W % LANE != 0:
        # Lane-sparse widths (W < 128 or not a multiple of 128): a Pallas
        # launch would be pure masked-store overhead -> do it in plain XLA.
        do = flip_flag[0] == 1
        img_o = jnp.where(do, jnp.flip(img, axis=-1), img)
        bbox_o = jnp.where(do, bboxes.at[:, 1].set(1.0 - bboxes[:, 1]), bboxes)
        return img_o, bbox_o

    rows = N * C * H
    img2d = img.reshape(rows, W)
    nw = W // LANE
    block_rows = _pick_block_rows(rows)
    grid_rows = rows // block_rows

    def img_in_map(i, w, flag_ref):
        # When flipping, read the mirrored 128-wide W tile; the lanes inside
        # the tile are reversed in-kernel.
        w_src = jnp.where(flag_ref[0] == 1, nw - 1 - w, w)
        return (i, w_src)

    img_out2d, bbox_out_all = pl.pallas_call(
        _flip_kernel,
        out_shape=(
            jax.ShapeDtypeStruct((rows, W), img.dtype),
            jax.ShapeDtypeStruct((grid_rows, B, F), bboxes.dtype),
        ),
        grid_spec=pltpu.PrefetchScalarGridSpec(
            num_scalar_prefetch=1,
            grid=(grid_rows, nw),
            in_specs=[
                pl.BlockSpec((block_rows, LANE), img_in_map),
                pl.BlockSpec((B, F), lambda i, w, flag: (0, 0)),
            ],
            out_specs=[
                pl.BlockSpec((block_rows, LANE), lambda i, w, flag: (i, w)),
                pl.BlockSpec((1, B, F), lambda i, w, flag: (i, 0, 0)),
            ],
        ),
        compiler_params=pltpu.CompilerParams(
            dimension_semantics=("parallel", "arbitrary"),
            vmem_limit_bytes=32 * 1024 * 1024,
        ),
    )(flip_flag, img2d, bboxes)

    return img_out2d.reshape(N, C, H, W), bbox_out_all[0]


# ----------------------------- main ----------------------------------------- #

if __name__ == "__main__":
    key = jax.random.PRNGKey(0)
    k_img, k_box, k_coin = jax.random.split(key, 3)

    # Small but lane-dense shapes: W = 128 so stores are full-lane vst.
    N, C, H, W = 2, 4, 16, 128
    B = 8  # bboxes, each [cls, xc, yc, w, h] in [0, 1]

    img = jax.random.uniform(k_img, (N, C, H, W), dtype=jnp.float32)
    bboxes = jax.random.uniform(k_box, (B, 5), dtype=jnp.float32)

    # Stand-in for the host-side `random.random() <= p` draw of the module.
    p = 0.5
    coin = jax.random.uniform(k_coin, ())
    rand_flag = (coin <= p).astype(jnp.int32).reshape(1)

    # Exercise both branches deterministically plus the random draw.
    for flag in (jnp.zeros((1,), jnp.int32),
                 jnp.ones((1,), jnp.int32),
                 rand_flag):
        img_out, bbox_out = random_horizontal_flip(img, bboxes, flag)
        jax.block_until_ready((img_out, bbox_out))

        do_flip = bool(flag[0])
        img_ref = jnp.flip(img, axis=-1) if do_flip else img
        bbox_ref = (bboxes.at[:, 1].set(1.0 - bboxes[:, 1])
                    if do_flip else bboxes)
        assert jnp.allclose(img_out, img_ref, atol=1e-6), "image mismatch"
        assert jnp.allclose(bbox_out, bbox_ref, atol=1e-6), "bbox mismatch"

    print("KERNEL_OK")
</pallas_src>

<mosaic_0001>
module attributes {stable_mosaic.version = 11 : i64} {
  func.func @_flip_kernel(%arg0: i32, %arg1: i32, %arg2: memref<1xi32, #tpu.memory_space<smem>>, %arg3: memref<64x128xf32, #tpu.memory_space<vmem>>, %arg4: memref<8x5xf32, #tpu.memory_space<vmem>>, %arg5: memref<64x128xf32, #tpu.memory_space<vmem>>, %arg6: memref<1x8x5xf32, #tpu.memory_space<vmem>>) attributes {dimension_semantics = [#tpu.dimension_semantics<parallel>, #tpu.dimension_semantics<arbitrary>], iteration_bounds = array<i64: 2, 1>, scalar_prefetch = 1 : i64, scratch_operands = 0 : i64, tpu.core_type = #tpu.core_type<tc>, window_params = [{transform_indices = @transform_0, window_bounds = array<i64: 64, 128>}, {pipeline_mode = #tpu.pipeline_mode<synchronous>, transform_indices = @transform_1, window_bounds = array<i64: 8, 5>}, {transform_indices = @transform_2, window_bounds = array<i64: 64, 128>}, {transform_indices = @transform_3, window_bounds = array<i64: 1, 8, 5>}]} {
    %c0 = arith.constant 0 : index
    %0 = memref.load %arg2[%c0] : memref<1xi32, #tpu.memory_space<smem>>
    %c1_i32 = arith.constant 1 : i32
    %1 = arith.cmpi eq, %0, %c1_i32 : i32
    %2 = arith.extui %1 : i1 to i32
    %c0_i32 = arith.constant 0 : i32
    %3 = arith.cmpi ne, %2, %c0_i32 : i32
    scf.if %3 {
      %7 = tpu.iota {dimensions = array<i32: 0>} : vector<128x128xi32>
      %8 = tpu.iota {dimensions = array<i32: 1>} : vector<128x128xi32>
      %9 = arith.addi %7, %8 : vector<128x128xi32>
      %c127_i32 = arith.constant 127 : i32
      %10 = vector.broadcast %c127_i32 : i32 to vector<128x128xi32>
      %11 = arith.cmpi eq, %9, %10 : vector<128x128xi32>
      %cst = arith.constant 1.000000e+00 : f32
      %cst_2 = arith.constant 0.000000e+00 : f32
      %12 = vector.broadcast %cst : f32 to vector<128x128xf32>
      %13 = vector.broadcast %cst_2 : f32 to vector<128x128xf32>
      %14 = arith.select %11, %12, %13 : vector<128x128xi1>, vector<128x128xf32>
      %c0_3 = arith.constant 0 : index
      %c0_4 = arith.constant 0 : index
      %15 = vector.load %arg3[%c0_3, %c0_4] : memref<64x128xf32, #tpu.memory_space<vmem>>, vector<64x128xf32>
      %cst_5 = arith.constant dense<0.000000e+00> : vector<64x128xf32>
      %16 = tpu.matmul %15, %14, %cst_5 {dimension_numbers = #tpu.dot_dimension_numbers<[1], [0], [0], [1], [0, 0, 1, 1], [], []>} : vector<64x128xf32>, vector<128x128xf32>, vector<64x128xf32> -> vector<64x128xf32>
      %c0_6 = arith.constant 0 : index
      %c0_7 = arith.constant 0 : index
      %17 = vector.load %arg5[%c0_6, %c0_7] : memref<64x128xf32, #tpu.memory_space<vmem>>, vector<64x128xf32>
      tpu.vector_store %arg5[%c0_6, %c0_7], %16 {strides = array<i32>} : memref<64x128xf32, #tpu.memory_space<vmem>>, vector<64x128xf32>,
      %c0_8 = arith.constant 0 : index
      %c0_9 = arith.constant 0 : index
      %18 = vector.load %arg4[%c0_8, %c0_9] : memref<8x5xf32, #tpu.memory_space<vmem>>, vector<8x5xf32>
      %19 = tpu.iota {dimensions = array<i32: 1>} : vector<8x5xi32>
      %c1_i32_10 = arith.constant 1 : i32
      %20 = vector.broadcast %c1_i32_10 : i32 to vector<8x5xi32>
      %21 = arith.cmpi eq, %19, %20 : vector<8x5xi32>
      %cst_11 = arith.constant 1.000000e+00 : f32
      %22 = vector.broadcast %cst_11 : f32 to vector<8x5xf32>
      %23 = arith.subf %22, %18 : vector<8x5xf32>
      %24 = arith.select %21, %23, %18 : vector<8x5xi1>, vector<8x5xf32>
      %c0_12 = arith.constant 0 : index
      %c0_13 = arith.constant 0 : index
      %c0_14 = arith.constant 0 : index
      %25 = vector.load %arg6[%c0_12, %c0_13, %c0_14] : memref<1x8x5xf32, #tpu.memory_space<vmem>>, vector<1x8x5xf32>
      %26 = vector.shape_cast %25 : vector<1x8x5xf32> to vector<8x5xf32>
      %27 = vector.shape_cast %24 : vector<8x5xf32> to vector<1x8x5xf32>
      tpu.vector_store %arg6[%c0_12, %c0_13, %c0_14], %27 {strides = array<i32>} : memref<1x8x5xf32, #tpu.memory_space<vmem>>, vector<1x8x5xf32>,
    } else {
    }
    %c0_i32_0 = arith.constant 0 : i32
    %4 = arith.cmpi eq, %0, %c0_i32_0 : i32
    %5 = arith.extui %4 : i1 to i32
    %c0_i32_1 = arith.constant 0 : i32
    %6 = arith.cmpi ne, %5, %c0_i32_1 : i32
    scf.if %6 {
      %c0_2 = arith.constant 0 : index
      %c0_3 = arith.constant 0 : index
      %7 = vector.load %arg3[%c0_2, %c0_3] : memref<64x128xf32, #tpu.memory_space<vmem>>, vector<64x128xf32>
      %c0_4 = arith.constant 0 : index
      %c0_5 = arith.constant 0 : index
      %8 = vector.load %arg5[%c0_4, %c0_5] : memref<64x128xf32, #tpu.memory_space<vmem>>, vector<64x128xf32>
      tpu.vector_store %arg5[%c0_4, %c0_5], %7 {strides = array<i32>} : memref<64x128xf32, #tpu.memory_space<vmem>>, vector<64x128xf32>,
      %c0_6 = arith.constant 0 : index
      %c0_7 = arith.constant 0 : index
      %9 = vector.load %arg4[%c0_6, %c0_7] : memref<8x5xf32, #tpu.memory_space<vmem>>, vector<8x5xf32>
      %c0_8 = arith.constant 0 : index
      %c0_9 = arith.constant 0 : index
      %c0_10 = arith.constant 0 : index
      %10 = vector.load %arg6[%c0_8, %c0_9, %c0_10] : memref<1x8x5xf32, #tpu.memory_space<vmem>>, vector<1x8x5xf32>
      %11 = vector.shape_cast %10 : vector<1x8x5xf32> to vector<8x5xf32>
      %12 = vector.shape_cast %9 : vector<8x5xf32> to vector<1x8x5xf32>
      tpu.vector_store %arg6[%c0_8, %c0_9, %c0_10], %12 {strides = array<i32>} : memref<1x8x5xf32, #tpu.memory_space<vmem>>, vector<1x8x5xf32>,
    } else {
    }
    return
  }
  func.func @transform_0(%arg0: i32, %arg1: i32, %arg2: memref<1xi32, #tpu.memory_space<smem>>) -> (i32, i32) {
    %c0 = arith.constant 0 : index
    %0 = memref.load %arg2[%c0] : memref<1xi32, #tpu.memory_space<smem>>
    %c1_i32 = arith.constant 1 : i32
    %1 = arith.cmpi eq, %0, %c1_i32 : i32
    %c0_i32 = arith.constant 0 : i32
    %2 = arith.subi %c0_i32, %arg1 : i32
    %3 = arith.select %1, %2, %arg1 : i32
    %c0_i32_0 = arith.constant 0 : i32
    return %arg0, %3 : i32, i32
  }
  func.func @transform_1(%arg0: i32, %arg1: i32, %arg2: memref<1xi32, #tpu.memory_space<smem>>) -> (i32, i32) {
    %c0_i32 = arith.constant 0 : i32
    %c0_i32_0 = arith.constant 0 : i32
    %c0_i32_1 = arith.constant 0 : i32
    return %c0_i32, %c0_i32_0 : i32, i32
  }
  func.func @transform_2(%arg0: i32, %arg1: i32, %arg2: memref<1xi32, #tpu.memory_space<smem>>) -> (i32, i32) {
    %c0_i32 = arith.constant 0 : i32
    return %arg0, %arg1 : i32, i32
  }
  func.func @transform_3(%arg0: i32, %arg1: i32, %arg2: memref<1xi32, #tpu.memory_space<smem>>) -> (i32, i32, i32) {
    %c0_i32 = arith.constant 0 : i32
    %c0_i32_0 = arith.constant 0 : i32
    %c0_i32_1 = arith.constant 0 : i32
    return %arg0, %c0_i32, %c0_i32_0 : i32, i32, i32
  }
}

</mosaic_0001>

<llo_original>
// kernel: tpu_custom_call.1
$region0: #{tpu_custom_call.1}
  #allocation0 [shape = 'u32[]', space=smem, size = 0x4, offset = 0x4, fixed_abs, tag = 'smem constant byte address 0x4 - core index']
  #allocation1 [shape = 'u32[144,128]{1,0:T(1,128)}', space=vmem, size = 0x12000, scoped, tag = 'internal scratch']
  #allocation2 [shape = 's32[1]{0}', space=sflag, size = 0x4, scoped, tag = 'scoped memory for tpu_custom_call.1']
  #allocation3 [shape = 's32[1]{0:T(128)S(6)}', space=smem, size = 0x200, scoped, tag = 'prefetched SMEM operand 0']
  %s0 = inlined_call_operand.<no memory space> [shape: s32[1], index: 0, kind: input, shape index: {}]
  %s1 = inlined_call_operand.hbm [shape: f32[128,128], index: 1, kind: input, shape index: {}]
  %s2 = inlined_call_operand.hbm [shape: f32[8,5], index: 2, kind: input, shape index: {}]
  %s3 = inlined_call_operand.hbm [shape: f32[128,128], index: 3, kind: output, shape index: {0}]
  %s4 = inlined_call_operand.vmem [shape: f32[2,8,5], index: 4, kind: output, shape index: {1}]
  %5 = xla_tuple %s3, %s4
  %s6 = sld [smem:[#allocation0]]
  $region65: #{tpu_custom_call.1} parent=0
    _
  %s8 = ssub.s32 1, %s6
  %s9 = scalar_select 0, %s8, %s6
  %10 = sst [smem:[#allocation3]] %s0
  $region1: #{tpu_custom_call.1} parent=0
    #allocation4 [shape = 'u8[65536]{0}', space=vmem, size = 0x10000, scoped, tag = 'input window, operand 1']
    #allocation5 [shape = 's32[2]{0}', space=sflag, size = 0x8, scoped, tag = 'scoped memory for tpu_custom_call.1']
    #allocation6 [shape = 's32[2]{0}', space=sflag, size = 0x8, scoped, tag = 'scoped memory for tpu_custom_call.1']
    #allocation7 [shape = 'u8[4096]{0}', space=vmem, size = 0x1000, scoped, tag = 'input window, operand 2, single buffered']
    #allocation8 [shape = 's32[1]{0}', space=sflag, size = 0x4, scoped, tag = 'scoped memory for tpu_custom_call.1']
    #allocation9 [shape = 'u8[65536]{0}', space=vmem, size = 0x10000, scoped, tag = 'output window, operand 0']
    %11 = vsyncpa [#allocation5], 0
    %s12 = scalar_lea.sflag [#allocation5], 1
    %13 = vsyncpa %s12, 0
    %14 = vsyncpa [#allocation8], 0
    %15 = vsyncpa [#allocation6], 0
    %s16 = scalar_lea.sflag [#allocation6], 1
    %17 = vsyncpa %s16, 0
    loop: start=0, step=1, limit=4
    $region2: #{tpu_custom_call.1} parent=1 // loop_pre_header
      _
    $region3: #{tpu_custom_call.1} parent=1 // loop_header
      %s19 = sphi 0, %s23
      %p20 = scmp.ge.s32.totalorder %s19, 4
      %s26 = sphi 0, %s38
      %s27 = sphi 0, %s34
      %s28 = sphi 0, %s26
      %s29 = sphi 0, %s27
      %s30 = sphi 0, %s28
      %s31 = sphi 0, %s29
      %s51 = sphi 0, %s53
      %s54 = sphi 0, %s51
      %s55 = sphi 0, %s54
      %s71 = sphi 0, %s55
      %s75 = sphi 0, %s75
      %s77 = sphi 0, %s75
      %s78 = sphi 0, %s77
      %s92 = sphi 0, %s78
      %s100 = sphi 0, %s102
      %s103 = sphi 0, %s100
      %s104 = sphi 0, %s103
      %s120 = sphi 0, %s104
      %s126 = sphi 0, %s128
      %s129 = sphi 0, %s126
      %s130 = sphi 0, %s129
      %s146 = sphi 0, %s130
    $region4: #{tpu_custom_call.1} parent=1 // loop_header_branch
      %22 = sbr.rel (%p20) target = $region8
    $region5: #{tpu_custom_call.1} parent=1 // loop_body
      %s24 = ssub.s32 %s19, 1
      %s25 = ssub.s32 %s19, 2
      %s32 = sadd.s32 1, %s27
      %p33 = scmp.ge.s32.totalorder %s32, 1
      %s34 = scalar_select %p33, 0, %s32
      %s35 = sadd.s32 1, %s26
      %s36 = scalar_select %p33, %s35, %s26
      %p37 = scmp.ge.s32.totalorder %s36, 2
      %s38 = scalar_select %p37, 0, %s36
      %s39 = sld [smem:[#allocation3]]
      %p40 = scmp.eq.s32.totalorder %s39, 1
      %s41 = ssub.s32 0, %s27
      %s42 = scalar_select %p40, %s41, %s27
      %s43 = sld [smem:[#allocation3]]
      %p44 = scmp.eq.s32.totalorder %s43, 1
      %s45 = ssub.s32 0, %s34
      %s46 = scalar_select %p44, %s45, %s34
      %s47 = ssub.s32 %s26, %s38
      %s48 = ssub.s32 %s42, %s46
      %s49 = sor.u32 %s47, %s48
      %p50 = scmp.eq.s32.totalorder %s49, 0
      %s52 = sadd.s32 %s51, 1
      %s53 = scalar_select %p50, %s51, %s52
      %p56 = pneg %p50
      %p57 = scmp.eq.s32.totalorder %s19, 1
      %p58 = por %p56, %p57
      %p59 = scmp.ne.s32.totalorder %s51, %s54
      %p60 = scmp.eq.s32.totalorder %s19, 0
      %p61 = por %p59, %p60
      %p62 = scmp.ne.s32.totalorder %s51, %s54
      %p63 = scmp.eq.s32.totalorder %s24, 1
      %p64 = por %p62, %p63
      %p65 = scmp.ne.s32.totalorder %s54, %s55
      %p66 = scmp.eq.s32.totalorder %s24, 0
      %p67 = por %p65, %p66
      %p68 = scmp.ne.s32.totalorder %s54, %s55
      %p69 = scmp.eq.s32.totalorder %s25, 1
      %p70 = por %p68, %p69
      %p72 = scmp.ne.s32.totalorder %s55, %s71
      %p73 = scmp.eq.s32.totalorder %s25, 0
      %p74 = por %p72, %p73
      %s76 = sadd.s32 %s75, 1
      %p79 = scmp.eq.s32.totalorder %s19, 1
      %p80 = scmp.ne.s32.totalorder %s75, %s77
      %p81 = scmp.eq.s32.totalorder %s19, 0
      %p82 = por %p80, %p81
      %p83 = scmp.ne.s32.totalorder %s75, %s77
      %p84 = scmp.eq.s32.totalorder %s24, 1
      %p85 = por %p83, %p84
      %p86 = scmp.ne.s32.totalorder %s77, %s78
      %p87 = scmp.eq.s32.totalorder %s24, 0
      %p88 = por %p86, %p87
      %p89 = scmp.ne.s32.totalorder %s77, %s78
      %p90 = scmp.eq.s32.totalorder %s25, 1
      %p91 = por %p89, %p90
      %p93 = scmp.ne.s32.totalorder %s78, %s92
      %p94 = scmp.eq.s32.totalorder %s25, 0
      %p95 = por %p93, %p94
      %s96 = ssub.s32 %s26, %s38
      %s97 = ssub.s32 %s27, %s34
      %s98 = sor.u32 %s96, %s97
      %p99 = scmp.eq.s32.totalorder %s98, 0
      %s101 = sadd.s32 %s100, 1
      %s102 = scalar_select %p99, %s100, %s101
      %p105 = pneg %p99
      %p106 = scmp.eq.s32.totalorder %s19, 1
      %p107 = por %p105, %p106
      %p108 = scmp.ne.s32.totalorder %s100, %s103
      %p109 = scmp.eq.s32.totalorder %s19, 0
      %p110 = por %p108, %p109
      %p111 = scmp.ne.s32.totalorder %s100, %s103
      %p112 = scmp.eq.s32.totalorder %s24, 1
      %p113 = por %p111, %p112
      %p114 = scmp.ne.s32.totalorder %s103, %s104
      %p115 = scmp.eq.s32.totalorder %s24, 0
      %p116 = por %p114, %p115
      %p117 = scmp.ne.s32.totalorder %s103, %s104
      %p118 = scmp.eq.s32.totalorder %s25, 1
      %p119 = por %p117, %p118
      %p121 = scmp.ne.s32.totalorder %s104, %s120
      %p122 = scmp.eq.s32.totalorder %s25, 0
      %p123 = por %p121, %p122
      %s124 = ssub.s32 %s26, %s38
      %p125 = scmp.eq.s32.totalorder %s124, 0
      %s127 = sadd.s32 %s126, 1
      %s128 = scalar_select %p125, %s126, %s127
      %p131 = pneg %p125
      %p132 = scmp.eq.s32.totalorder %s19, 1
      %p133 = por %p131, %p132
      %p134 = scmp.ne.s32.totalorder %s126, %s129
      %p135 = scmp.eq.s32.totalorder %s19, 0
      %p136 = por %p134, %p135
      %p137 = scmp.ne.s32.totalorder %s126, %s129
      %p138 = scmp.eq.s32.totalorder %s24, 1
      %p139 = por %p137, %p138
      %p140 = scmp.ne.s32.totalorder %s129, %s130
      %p141 = scmp.eq.s32.totalorder %s24, 0
      %p142 = por %p140, %p141
      %p143 = scmp.ne.s32.totalorder %s129, %s130
      %p144 = scmp.eq.s32.totalorder %s25, 1
      %p145 = por %p143, %p144
      %p147 = scmp.ne.s32.totalorder %s130, %s146
      %p148 = scmp.eq.s32.totalorder %s25, 0
      %p149 = por %p147, %p148
      %p150 = scmp.le.s32.totalorder 1, %s19
      %p151 = scmp.lt.s32.totalorder %s19, 3
      %p152 = pnand %p150, %p151
      %p153 = pneg %p152
      // Predicated region
      $region9: #{tpu_custom_call.1} parent=5 // pred_check
        _
      $region10: #{tpu_custom_call.1} parent=5 // pred_check_branch
        %155 = sbr.rel (%p152) target = $region12
      $region11: #{tpu_custom_call.1} parent=5 // pred_region
        %s156 = ssub.s32 %s19, 1
        // Predicated region
        $region13: #{tpu_custom_call.1} parent=11 // pred_check
          %p157 = pneg %p88
        $region14: #{tpu_custom_call.1} parent=11 // pred_check_branch
          %159 = sbr.rel (%p157) target = $region16
        $region15: #{tpu_custom_call.1} parent=11 // pred_region
          %s161 = ssub.s32 128, 128
          %162 = vsyncadd [#allocation8], %s161
          %s164 = sshll.u32 [#allocation7], 4
          %s165 = int_to_ptr.vmem [resolvable:$true] %s164
          %167 = dma.hbm_to_vmem [thread:$0]  %s2, 128, %s165, [#allocation8]
        $region16: #{tpu_custom_call.1} parent=11 // pred_fallthru
          _
      $region12: #{tpu_custom_call.1} parent=5 // pred_fallthru
        _
      %p168 = scmp.lt.s32.totalorder %s19, 2
      // Predicated region
      $region17: #{tpu_custom_call.1} parent=5 // pred_check
        %p169 = pneg %p168
      $region18: #{tpu_custom_call.1} parent=5 // pred_check_branch
        %171 = sbr.rel (%p169) target = $region20
      $region19: #{tpu_custom_call.1} parent=5 // pred_region
        // Predicated region
        $region21: #{tpu_custom_call.1} parent=19 // pred_check
          %p172 = pneg %p61
        $region22: #{tpu_custom_call.1} parent=19 // pred_check_branch
          %174 = sbr.rel (%p172) target = $region24
        $region23: #{tpu_custom_call.1} parent=19 // pred_region
          %s175 = sand.u32 %s51, 1
          %s176 = scalar_lea.sflag [#allocation5], %s175
          %s177 = sand.u32 %s51, 1
          %s178 = smul.addr %s177, 64
          %s179 = scalar_lea.vmem [#allocation4], %s178
          %s180 = sld [smem:[#allocation3]]
          %p181 = scmp.eq.s32.totalorder %s180, 1
          %s182 = ssub.s32 0, %s27
          %s183 = scalar_select %p181, %s182, %s27
          %s184 = smul.u32 8, %s26
          %s186 = ssub.s32 1024, 1024
          %187 = vsyncadd %s176, %s186
          %s188 = sadd.s32 %s183, %s184
          %s189 = smul.addr %s188, 128
          %s190 = scalar_lea.hbm %s1, %s189
          %s191 = sshll.u32 %s179, 4
          %s192 = int_to_ptr.vmem [resolvable:$true] %s191
          %197 = dma.hbm_to_vmem [thread:$0]  %s190, 1024, %s192, %s176, 128, 128, 8
        $region24: #{tpu_custom_call.1} parent=19 // pred_fallthru
          _
      $region20: #{tpu_custom_call.1} parent=5 // pred_fallthru
        _
      %p198 = scmp.le.s32.totalorder 1, %s19
      %p199 = scmp.lt.s32.totalorder %s19, 3
      %p200 = pnand %p198, %p199
      %p201 = pneg %p200
      // Predicated region
      $region25: #{tpu_custom_call.1} parent=5 // pred_check
        _
      $region26: #{tpu_custom_call.1} parent=5 // pred_check_branch
        %203 = sbr.rel (%p200) target = $region28
      $region27: #{tpu_custom_call.1} parent=5 // pred_region
        %s204 = ssub.s32 %s19, 1
        %s205 = sand.u32 %s54, 1
        %s206 = scalar_lea.sflag [#allocation5], %s205
        %s207 = sand.u32 %s54, 1
        %s208 = smul.addr %s207, 64
        %s209 = scalar_lea.vmem [#allocation4], %s208
        // Predicated region
        $region29: #{tpu_custom_call.1} parent=27 // pred_check
          %p210 = pneg %p67
        $region30: #{tpu_custom_call.1} parent=27 // pred_check_branch
          %212 = sbr.rel (%p210) target = $region32
        $region31: #{tpu_custom_call.1} parent=27 // pred_region
          %213 = dma.done %s206, 1024
        $region32: #{tpu_custom_call.1} parent=27 // pred_fallthru
          _
        // Predicated region
        $region33: #{tpu_custom_call.1} parent=27 // pred_check
          %p214 = pneg %p88
        $region34: #{tpu_custom_call.1} parent=27 // pred_check_branch
          %216 = sbr.rel (%p214) target = $region36
        $region35: #{tpu_custom_call.1} parent=27 // pred_region
          %217 = dma.done [#allocation8], 128
        $region36: #{tpu_custom_call.1} parent=27 // pred_fallthru
          _
        %s218 = sand.u32 %s54, 1
        %s219 = scalar_lea.sflag [#allocation5], %s218
        %s220 = sand.u32 %s54, 1
        %s221 = smul.addr %s220, 64
        %s222 = scalar_lea.vmem [#allocation4], %s221
        %p223 = pneg %p67
        %p224 = pneg %p64
        %p225 = pneg %p88
        %p226 = pneg %p85
        %p227 = pneg %p116
        %p228 = pneg %p113
        %s229 = sand.u32 %s103, 1
        %s230 = scalar_lea.sflag [#allocation6], %s229
        %s231 = sand.u32 %s103, 1
        %s232 = smul.addr %s231, 64
        %s233 = scalar_lea.vmem [#allocation9], %s232
        %p234 = pneg %p142
        %p235 = pneg %p139
        %p236 = scmp.lt.s32.totalorder %s28, 1
        %s237 = scalar_select %p236, %s28, 1
        %s238 = smul.addr %s237, 8
        %s239 = scalar_lea.vmem %s4, %s238
        %s240 = sld [smem:[#allocation3]]
        %p241 = scmp.eq.s32.totalorder %s240, 1
        %s242 = ssub.s32 0, %s29
        %s243 = scalar_select %p241, %s242, %s29
        %s244 = smul.u32 8, %s28
        %s245 = smul.u32 8, %s28
        %p246 = scmp.lt.s32.totalorder %s28, 1
        %s247 = scalar_select %p246, %s28, 1
        %s248 = smul.addr %s247, 8
        %s249 = scalar_lea.vmem %s4, %s248
        %s250 = sld [smem:[#allocation3]]
        %p251 = scmp.eq.s32.totalorder %s250, 1
        // Predicated region
        $region37: #{tpu_custom_call.1} parent=27 // pred_check
          %p252 = pneg %p251
        $region38: #{tpu_custom_call.1} parent=27 // pred_check_branch
          %254 = sbr.rel (%p252) target = $region40
        $region39: #{tpu_custom_call.1} parent=27 // pred_region
          %v255 = vlaneseq
          %v256 = vshrl.u32 %v255, 7
          %v257 = vadd.s32 %v256, 8
          %v258 = vadd.s32 %v256, 16
          %v259 = vadd.s32 %v256, 24
          %v260 = vadd.s32 %v256, 32
          %v261 = vadd.s32 %v256, 40
          %v262 = vadd.s32 %v256, 48
          %v263 = vadd.s32 %v256, 56
          %v264 = vadd.s32 %v256, 64
          %v265 = vadd.s32 %v256, 72
          %v266 = vadd.s32 %v256, 80
          %v267 = vadd.s32 %v256, 88
          %v268 = vadd.s32 %v256, 96
          %v269 = vadd.s32 %v256, 104
          %v270 = vadd.s32 %v256, 112
          %v271 = vadd.s32 %v256, 120
          %v272 = vlaneseq
          %v273 = vand.u32 %v272, 127
          %v274 = vadd.s32 %v256, %v273
          %v275 = vadd.s32 %v257, %v273
          %v276 = vadd.s32 %v258, %v273
          %v277 = vadd.s32 %v259, %v273
          %v278 = vadd.s32 %v260, %v273
          %v279 = vadd.s32 %v261, %v273
          %v280 = vadd.s32 %v262, %v273
          %v281 = vadd.s32 %v263, %v273
          %v282 = vadd.s32 %v264, %v273
          %v283 = vadd.s32 %v265, %v273
          %v284 = vadd.s32 %v266, %v273
          %v285 = vadd.s32 %v267, %v273
          %v286 = vadd.s32 %v268, %v273
          %v287 = vadd.s32 %v269, %v273
          %v288 = vadd.s32 %v270, %v273
          %v289 = vadd.s32 %v271, %v273
          %vm290 = vcmp.eq.s32.totalorder %v274, 127
          %vm291 = vcmp.eq.s32.totalorder %v275, 127
          %vm292 = vcmp.eq.s32.totalorder %v276, 127
          %vm293 = vcmp.eq.s32.totalorder %v277, 127
          %vm294 = vcmp.eq.s32.totalorder %v278, 127
          %vm295 = vcmp.eq.s32.totalorder %v279, 127
          %vm296 = vcmp.eq.s32.totalorder %v280, 127
          %vm297 = vcmp.eq.s32.totalorder %v281, 127
          %vm298 = vcmp.eq.s32.totalorder %v282, 127
          %vm299 = vcmp.eq.s32.totalorder %v283, 127
          %vm300 = vcmp.eq.s32.totalorder %v284, 127
          %vm301 = vcmp.eq.s32.totalorder %v285, 127
          %vm302 = vcmp.eq.s32.totalorder %v286, 127
          %vm303 = vcmp.eq.s32.totalorder %v287, 127
          %vm304 = vcmp.eq.s32.totalorder %v288, 127
          %vm305 = vcmp.eq.s32.totalorder %v289, 127
          %v306 = vsel %vm290, 1.0, 0.0
          %v307 = vsel %vm291, 1.0, 0.0
          %v308 = vsel %vm292, 1.0, 0.0
          %v309 = vsel %vm293, 1.0, 0.0
          %v310 = vsel %vm294, 1.0, 0.0
          %v311 = vsel %vm295, 1.0, 0.0
          %v312 = vsel %vm296, 1.0, 0.0
          %v313 = vsel %vm297, 1.0, 0.0
          %v314 = vsel %vm298, 1.0, 0.0
          %v315 = vsel %vm299, 1.0, 0.0
          %v316 = vsel %vm300, 1.0, 0.0
          %v317 = vsel %vm301, 1.0, 0.0
          %v318 = vsel %vm302, 1.0, 0.0
          %v319 = vsel %vm303, 1.0, 0.0
          %v320 = vsel %vm304, 1.0, 0.0
          %v321 = vsel %vm305, 1.0, 0.0
          %v322 = vld [vmem:[%s209] sm:$0xff]
          %v323 = vld [vmem:[%s209 + $0x8] sm:$0xff]
          %v324 = vld [vmem:[%s209 + $0x10] sm:$0xff]
          %v325 = vld [vmem:[%s209 + $0x18] sm:$0xff]
          %v326 = vld [vmem:[%s209 + $0x20] sm:$0xff]
          %v327 = vld [vmem:[%s209 + $0x28] sm:$0xff]
          %v328 = vld [vmem:[%s209 + $0x30] sm:$0xff]
          %v329 = vld [vmem:[%s209 + $0x38] sm:$0xff]
          %330 = vmatprep.subr.mxu0 0.0
          %331 = vmatpush1.msra.mxu0 %v306
          %332 = vmatprep.subr.mxu0 0.0
          %333 = vmatpush1.msra.mxu0 %v307
          %334 = vmatprep.subr.mxu0 0.0
          %335 = vmatpush1.msra.mxu0 %v308
          %336 = vmatprep.subr.mxu0 0.0
          %337 = vmatpush1.msra.mxu0 %v309
          %338 = vmatprep.subr.mxu0 0.0
          %339 = vmatpush1.msra.mxu0 %v310
          %340 = vmatprep.subr.mxu0 0.0
          %341 = vmatpush1.msra.mxu0 %v311
          %342 = vmatprep.subr.mxu0 0.0
          %343 = vmatpush1.msra.mxu0 %v312
          %344 = vmatprep.subr.mxu0 0.0
          %345 = vmatpush1.msra.mxu0 %v313
          %346 = vmatprep.subr.mxu0 0.0
          %347 = vmatpush1.msra.mxu0 %v314
          %348 = vmatprep.subr.mxu0 0.0
          %349 = vmatpush1.msra.mxu0 %v315
          %350 = vmatprep.subr.mxu0 0.0
          %351 = vmatpush1.msra.mxu0 %v316
          %352 = vmatprep.subr.mxu0 0.0
          %353 = vmatpush1.msra.mxu0 %v317
          %354 = vmatprep.subr.mxu0 0.0
          %355 = vmatpush1.msra.mxu0 %v318
          %356 = vmatprep.subr.mxu0 0.0
          %357 = vmatpush1.msra.mxu0 %v319
          %358 = vmatprep.subr.mxu0 0.0
          %359 = vmatpush1.msra.mxu0 %v320
          %360 = vmatprep.subr.mxu0 0.0
          %361 = vmatpush1.msra.mxu0 %v321
          %362 = vmatprep.subr.mxu0 0.0
          %363 = vmatpush1.msra.mxu0 0.0
          %364 = vmatprep.subr.mxu0 0.0
          %365 = vmatpush1.msra.mxu0 0.0
          %366 = vmatprep.subr.mxu0 0.0
          %367 = vmatpush1.msra.mxu0 0.0
          %368 = vmatprep.subr.mxu0 0.0
          %369 = vmatpush1.msra.mxu0 0.0
          %370 = vmatprep.subr.mxu0 0.0
          %371 = vmatpush1.msra.mxu0 0.0
          %372 = vmatprep.subr.mxu0 0.0
          %373 = vmatpush1.msra.mxu0 0.0
          %374 = vmatprep.subr.mxu0 0.0
          %375 = vmatpush1.msra.mxu0 0.0
          %376 = vmatprep.subr.mxu0 0.0
          %377 = vmatpush1.msra.mxu0 0.0
          %378 = vmatprep.subr.mxu0 0.0
          %379 = vmatpush1.msra.mxu0 0.0
          %380 = vmatprep.subr.mxu0 0.0
          %381 = vmatpush1.msra.mxu0 0.0
          %382 = vmatprep.subr.mxu0 0.0
          %383 = vmatpush1.msra.mxu0 0.0
          %384 = vmatprep.subr.mxu0 0.0
          %385 = vmatpush1.msra.mxu0 0.0
          %386 = vmatprep.subr.mxu0 0.0
          %387 = vmatpush1.msra.mxu0 0.0
          %388 = vmatprep.subr.mxu0 0.0
          %389 = vmatpush1.msra.mxu0 0.0
          %390 = vmatprep.subr.mxu0 0.0
          %391 = vmatpush1.msra.mxu0 0.0
          %392 = vmatprep.subr.mxu0 0.0
          %393 = vmatpush1.msra.mxu0 0.0
          %394 = vmatprep.mubr.f32.mxu0 0.0
          %395 = vmatmul.mubr.f32.gmra.mrb[0].mxu0 %v322
          %v396 = vpop.f32.mrb[0].mxu0
          %v397 = vadd.f32 0.0, %v396
          %v398 = vpop.f32.mrb[0].mxu0
          %399 = vmatprep.mubr.f32.mxu0 0.0
          %400 = vmatmul.mubr.f32.gmra.mrb[0].mxu0 %v323
          %v401 = vpop.f32.mrb[0].mxu0
          %v402 = vadd.f32 0.0, %v401
          %v403 = vpop.f32.mrb[0].mxu0
          %404 = vmatprep.mubr.f32.mxu0 0.0
          %405 = vmatmul.mubr.f32.gmra.mrb[0].mxu0 %v324
          %v406 = vpop.f32.mrb[0].mxu0
          %v407 = vadd.f32 0.0, %v406
          %v408 = vpop.f32.mrb[0].mxu0
          %409 = vmatprep.mubr.f32.mxu0 0.0
          %410 = vmatmul.mubr.f32.gmra.mrb[0].mxu0 %v325
          %v411 = vpop.f32.mrb[0].mxu0
          %v412 = vadd.f32 0.0, %v411
          %v413 = vpop.f32.mrb[0].mxu0
          %414 = vmatprep.mubr.f32.mxu0 0.0
          %415 = vmatmul.mubr.f32.gmra.mrb[0].mxu0 %v326
          %v416 = vpop.f32.mrb[0].mxu0
          %v417 = vadd.f32 0.0, %v416
          %v418 = vpop.f32.mrb[0].mxu0
          %419 = vmatprep.mubr.f32.mxu0 0.0
          %420 = vmatmul.mubr.f32.gmra.mrb[0].mxu0 %v327
          %v421 = vpop.f32.mrb[0].mxu0
          %v422 = vadd.f32 0.0, %v421
          %v423 = vpop.f32.mrb[0].mxu0
          %424 = vmatprep.mubr.f32.mxu0 0.0
          %425 = vmatmul.mubr.f32.gmra.mrb[0].mxu0 %v328
          %v426 = vpop.f32.mrb[0].mxu0
          %v427 = vadd.f32 0.0, %v426
          %v428 = vpop.f32.mrb[0].mxu0
          %429 = vmatprep.mubr.f32.mxu0 0.0
          %430 = vmatmul.mubr.f32.gmra.mrb[0].mxu0 %v329
          %v431 = vpop.f32.mrb[0].mxu0
          %v432 = vadd.f32 0.0, %v431
          %v433 = vpop.f32.mrb[0].mxu0
          %434 = vdwg.mxu0
          %435 = vst [vmem:[%s233] sm:$0xff] %v397
          %436 = vst [vmem:[%s233 + $0x8] sm:$0xff] %v402
          %437 = vst [vmem:[%s233 + $0x10] sm:$0xff] %v407
          %438 = vst [vmem:[%s233 + $0x18] sm:$0xff] %v412
          %439 = vst [vmem:[%s233 + $0x20] sm:$0xff] %v417
          %440 = vst [vmem:[%s233 + $0x28] sm:$0xff] %v422
          %441 = vst [vmem:[%s233 + $0x30] sm:$0xff] %v427
          %442 = vst [vmem:[%s233 + $0x38] sm:$0xff] %v432
          %v443 = vld [vmem:[#allocation7] sm:$0xff]
          %vm444 = vcmp.eq.s32.totalorder %v273, 1
          %v445 = vsub.f32 1.0, %v443
          %v446 = vsel %vm444, %v445, %v443
          %vm447 = vcmask 39936
          %448 = vst.msk [vmem:[%s249] sm:$0xff] %vm447, %v446
        $region40: #{tpu_custom_call.1} parent=27 // pred_fallthru
          _
        %p449 = scmp.eq.s32.totalorder %s250, 0
        // Predicated region
        $region41: #{tpu_custom_call.1} parent=27 // pred_check
          %p450 = pneg %p449
        $region42: #{tpu_custom_call.1} parent=27 // pred_check_branch
          %452 = sbr.rel (%p450) target = $region44
        $region43: #{tpu_custom_call.1} parent=27 // pred_region
          %v453 = vld [vmem:[%s209] sm:$0xff]
          %v454 = vld [vmem:[%s209 + $0x8] sm:$0xff]
          %v455 = vld [vmem:[%s209 + $0x10] sm:$0xff]
          %v456 = vld [vmem:[%s209 + $0x18] sm:$0xff]
          %v457 = vld [vmem:[%s209 + $0x20] sm:$0xff]
          %v458 = vld [vmem:[%s209 + $0x28] sm:$0xff]
          %v459 = vld [vmem:[%s209 + $0x30] sm:$0xff]
          %v460 = vld [vmem:[%s209 + $0x38] sm:$0xff]
          %461 = vst [vmem:[%s233] sm:$0xff] %v453
          %462 = vst [vmem:[%s233 + $0x8] sm:$0xff] %v454
          %463 = vst [vmem:[%s233 + $0x10] sm:$0xff] %v455
          %464 = vst [vmem:[%s233 + $0x18] sm:$0xff] %v456
          %465 = vst [vmem:[%s233 + $0x20] sm:$0xff] %v457
          %466 = vst [vmem:[%s233 + $0x28] sm:$0xff] %v458
          %467 = vst [vmem:[%s233 + $0x30] sm:$0xff] %v459
          %468 = vst [vmem:[%s233 + $0x38] sm:$0xff] %v460
          %v469 = vld [vmem:[#allocation7] sm:$0xff]
          %vm470 = vcmask 39936
          %471 = vst.msk [vmem:[%s249] sm:$0xff] %vm470, %v469
        $region44: #{tpu_custom_call.1} parent=27 // pred_fallthru
          _
        %s472 = sand.u32 %s103, 1
        %s473 = scalar_lea.sflag [#allocation6], %s472
        %s474 = sand.u32 %s103, 1
        %s475 = smul.addr %s474, 64
        %s476 = scalar_lea.vmem [#allocation9], %s475
        %p477 = scmp.lt.s32.totalorder %s28, 1
        %s478 = scalar_select %p477, %s28, 1
        %s479 = smul.addr %s478, 8
        %s480 = scalar_lea.vmem %s4, %s479
        // Predicated region
        $region45: #{tpu_custom_call.1} parent=27 // pred_check
          %p481 = pneg %p113
        $region46: #{tpu_custom_call.1} parent=27 // pred_check_branch
          %483 = sbr.rel (%p481) target = $region48
        $region47: #{tpu_custom_call.1} parent=27 // pred_region
          %s484 = smul.u32 8, %s28
          %s486 = ssub.s32 1024, 1024
          %487 = vsyncadd %s473, %s486
          %s488 = sadd.s32 %s29, %s484
          %s489 = smul.addr %s488, 128
          %s490 = scalar_lea.hbm %s3, %s489
          %s491 = sshll.u32 %s476, 4
          %s492 = int_to_ptr.vmem [resolvable:$true] %s491
          %497 = dma.vmem_to_hbm [thread:$0]  %s492, 1024, %s490, %s473, 128, 128, 8
        $region48: #{tpu_custom_call.1} parent=27 // pred_fallthru
          _
        // Predicated region
        $region49: #{tpu_custom_call.1} parent=27 // pred_check
          %p498 = pneg %p139
        $region50: #{tpu_custom_call.1} parent=27 // pred_check_branch
          %500 = sbr.rel (%p498) target = $region52
        $region51: #{tpu_custom_call.1} parent=27 // pred_region
          _
        $region52: #{tpu_custom_call.1} parent=27 // pred_fallthru
          _
      $region28: #{tpu_custom_call.1} parent=5 // pred_fallthru
        _
      %p501 = scmp.le.s32.totalorder 2, %s19
      // Predicated region
      $region53: #{tpu_custom_call.1} parent=5 // pred_check
        %p502 = pneg %p501
      $region54: #{tpu_custom_call.1} parent=5 // pred_check_branch
        %504 = sbr.rel (%p502) target = $region56
      $region55: #{tpu_custom_call.1} parent=5 // pred_region
        %s505 = ssub.s32 %s19, 2
        // Predicated region
        $region57: #{tpu_custom_call.1} parent=55 // pred_check
          %p506 = pneg %p119
        $region58: #{tpu_custom_call.1} parent=55 // pred_check_branch
          %508 = sbr.rel (%p506) target = $region60
        $region59: #{tpu_custom_call.1} parent=55 // pred_region
          %s509 = sand.u32 %s104, 1
          %s510 = scalar_lea.sflag [#allocation6], %s509
          %s511 = sand.u32 %s104, 1
          %s512 = smul.addr %s511, 64
          %s513 = scalar_lea.vmem [#allocation9], %s512
          %514 = dma.done %s510, 1024
        $region60: #{tpu_custom_call.1} parent=55 // pred_fallthru
          _
        // Predicated region
        $region61: #{tpu_custom_call.1} parent=55 // pred_check
          %p515 = pneg %p145
        $region62: #{tpu_custom_call.1} parent=55 // pred_check_branch
          %517 = sbr.rel (%p515) target = $region64
        $region63: #{tpu_custom_call.1} parent=55 // pred_region
          %p518 = scmp.lt.s32.totalorder %s30, 1
          %s519 = scalar_select %p518, %s30, 1
          %s520 = smul.addr %s519, 8
          %s521 = scalar_lea.vmem %s4, %s520
        $region64: #{tpu_custom_call.1} parent=55 // pred_fallthru
          _
      $region56: #{tpu_custom_call.1} parent=5 // pred_fallthru
        _
    $region6: #{tpu_custom_call.1} parent=1 // loop_footer
      %s23 = sadd.s32 1, %s19
    $region7: #{tpu_custom_call.1} parent=1 // loop_footer_branch
      %18 = sbr.rel target = $region3
    $region8: #{tpu_custom_call.1} parent=1 // loop_exit
      _
    %522 = vsyncpa [#allocation5], 1
    %s523 = scalar_lea.sflag [#allocation5], 1
    %524 = vsyncpa %s523, 1
    %525 = vsyncpa [#allocation8], 1
    %526 = vsyncpa [#allocation6], 1
    %s527 = scalar_lea.sflag [#allocation6], 1
    %528 = vsyncpa %s527, 1

</llo_original>
